<compile_context>
chip_gen: v7x
topology: tpu7x:2x2x1
jax: 0.10.0
libtpu: 0.0.40
codegen_flags: <defaults>
</compile_context>

<pallas_src>
import functools

import jax
import jax.numpy as jnp
from jax.experimental import pallas as pl
from jax.experimental.pallas import tpu as pltpu

LANES = 128
SUBLANES = 8
VMEM_INPUT_BUDGET = 8 << 20     # bytes for 2 inputs x 2 pipeline buffers
VMEM_LIMIT_BYTES = 32 << 20     # safe on v5e/v6e (128 MiB) and v7x (64 MiB)


def _num_core_splits():
    """2 grid-parallel splits on v7x (2 TCs/chip), otherwise 1."""
    try:
        kind = jax.devices()[0].device_kind.lower()
    except Exception:
        return 1
    return 2 if "v7" in kind else 1


def _dice_partial_kernel(x_ref, t_ref, inter_ref, psum_ref,
                         *, tile_rows, tiles_per_core, total_blocks):
    c = pl.program_id(0)          # core-split index
    i = pl.program_id(1)          # reduction step within this split

    @pl.when(i == 0)
    def _init():
        inter_ref[...] = jnp.zeros_like(inter_ref)
        psum_ref[...] = jnp.zeros_like(psum_ref)

    # Skip clamped duplicate tail tiles (only possible when total_blocks is
    # not divisible by the number of core splits).  Interior tiles need no
    # per-element masking: the wrapper only feeds exact multiples of the tile.
    t_idx = c * tiles_per_core + i

    @pl.when(t_idx < total_blocks)
    def _accumulate():
        p = jax.nn.sigmoid(x_ref[...].astype(jnp.float32))
        t = t_ref[...].astype(jnp.float32)
        folds = tile_rows // SUBLANES
        # Fold the (tile_rows, 128) tile into the fixed (8, 128) accumulator:
        # sum over the leading axis = vreg+vreg VPU adds only.
        inter_ref[...] += (p * t).reshape(folds, SUBLANES, LANES).sum(axis=0)
        psum_ref[...] += (p + t).reshape(folds, SUBLANES, LANES).sum(axis=0)


def dice_loss(inputs, targets, smooth=1.0):
    x = jnp.ravel(inputs)
    t = jnp.ravel(targets)
    n = x.shape[0]

    itemsize = x.dtype.itemsize
    # Sublane alignment for the block's second-minor dim (8 for f32, 16 bf16).
    row_align = SUBLANES * max(1, 4 // itemsize)
    max_tile_rows = max(
        row_align,
        (VMEM_INPUT_BUDGET // (2 * 2 * LANES * itemsize)) // row_align * row_align,
    )

    rows_full = n // LANES
    tile_rows = min(max_tile_rows, (rows_full // row_align) * row_align)

    intersection = jnp.float32(0.0)
    psum = jnp.float32(0.0)
    n_main = 0
    num_splits = _num_core_splits()

    if tile_rows >= row_align:
        total_blocks = rows_full // tile_rows          # >= 1 here
        rows_main = total_blocks * tile_rows
        n_main = rows_main * LANES
        tiles_per_core = pl.cdiv(total_blocks, num_splits)

        x2 = x[:n_main].reshape(rows_main, LANES)
        t2 = t[:n_main].reshape(rows_main, LANES)

        def in_map(c, i):
            # Clamp so duplicate tail iterations stay in bounds (skipped in
            # the kernel via pl.when).
            return (jnp.minimum(c * tiles_per_core + i, total_blocks - 1), 0)

        def out_map(c, i):
            return (c, 0)

        kernel = functools.partial(
            _dice_partial_kernel,
            tile_rows=tile_rows,
            tiles_per_core=tiles_per_core,
            total_blocks=total_blocks,
        )

        part_shape = jax.ShapeDtypeStruct(
            (num_splits * SUBLANES, LANES), jnp.float32)

        inter_part, psum_part = pl.pallas_call(
            kernel,
            out_shape=(part_shape, part_shape),
            grid=(num_splits, tiles_per_core),
            in_specs=[
                pl.BlockSpec((tile_rows, LANES), in_map),
                pl.BlockSpec((tile_rows, LANES), in_map),
            ],
            out_specs=[
                pl.BlockSpec((SUBLANES, LANES), out_map),
                pl.BlockSpec((SUBLANES, LANES), out_map),
            ],
            compiler_params=pltpu.CompilerParams(
                dimension_semantics=("parallel", "arbitrary"),
                vmem_limit_bytes=VMEM_LIMIT_BYTES,
            ),
        )(x2, t2)

        intersection = jnp.sum(inter_part)
        psum = jnp.sum(psum_part)          # sum(sigmoid(x)) + sum(targets)

    # Ragged tail (< tile_rows*128 elements): tiny wrapper-side reduction,
    # avoids any full-array pad copy.
    if n_main < n:
        x_tail = x[n_main:]
        t_tail = t[n_main:].astype(jnp.float32)
        p_tail = jax.nn.sigmoid(x_tail.astype(jnp.float32))
        intersection = intersection + jnp.sum(p_tail * t_tail)
        psum = psum + jnp.sum(p_tail) + jnp.sum(t_tail)

    dice = (2.0 * intersection + smooth) / (psum + smooth)
    return 1.0 - dice


def _dice_loss_ref(inputs, targets, smooth=1.0):
    p = jax.nn.sigmoid(inputs.astype(jnp.float32)).ravel()
    t = targets.astype(jnp.float32).ravel()
    intersection = jnp.sum(p * t)
    dice = (2.0 * intersection + smooth) / (jnp.sum(p) + jnp.sum(t) + smooth)
    return 1.0 - dice


if __name__ == "__main__":
    key = jax.random.PRNGKey(0)
    k1, k2 = jax.random.split(key)
    # NCHW logits and binary targets, matching the PyTorch module's use case.
    x = jax.random.normal(k1, (2, 4, 16, 16), dtype=jnp.float32)
    t = (jax.random.uniform(k2, (2, 4, 16, 16)) > 0.5).astype(jnp.float32)

    out = dice_loss(x, t)
    jax.block_until_ready(out)

    ref = _dice_loss_ref(x, t)
    assert jnp.allclose(out, ref, atol=1e-5, rtol=1e-5), (out, ref)
    print("KERNEL_OK")
</pallas_src>

<mosaic_0001>
module attributes {stable_mosaic.version = 11 : i64} {
  func.func @_dice_partial_kernel(%arg0: i32, %arg1: i32, %arg2: memref<16x128xf32, #tpu.memory_space<vmem>>, %arg3: memref<16x128xf32, #tpu.memory_space<vmem>>, %arg4: memref<8x128xf32, #tpu.memory_space<vmem>>, %arg5: memref<8x128xf32, #tpu.memory_space<vmem>>) attributes {dimension_semantics = [#tpu.dimension_semantics<parallel>, #tpu.dimension_semantics<arbitrary>], iteration_bounds = array<i64: 1, 1>, scalar_prefetch = 0 : i64, scratch_operands = 0 : i64, tpu.core_type = #tpu.core_type<tc>, window_params = [{transform_indices = @transform_0, window_bounds = array<i64: 16, 128>}, {transform_indices = @transform_1, window_bounds = array<i64: 16, 128>}, {transform_indices = @transform_2, window_bounds = array<i64: 8, 128>}, {transform_indices = @transform_3, window_bounds = array<i64: 8, 128>}]} {
    %c0_i32 = arith.constant 0 : i32
    %0 = arith.cmpi eq, %arg1, %c0_i32 : i32
    %1 = arith.extui %0 : i1 to i32
    %c0_i32_0 = arith.constant 0 : i32
    %2 = arith.cmpi ne, %1, %c0_i32_0 : i32
    scf.if %2 {
      %cst = arith.constant 0.000000e+00 : f32
      %8 = vector.broadcast %cst : f32 to vector<8x128xf32>
      %c0 = arith.constant 0 : index
      %c0_3 = arith.constant 0 : index
      %9 = vector.load %arg4[%c0, %c0_3] : memref<8x128xf32, #tpu.memory_space<vmem>>, vector<8x128xf32>
      tpu.vector_store %arg4[%c0, %c0_3], %8 {strides = array<i32>} : memref<8x128xf32, #tpu.memory_space<vmem>>, vector<8x128xf32>,
      %cst_4 = arith.constant 0.000000e+00 : f32
      %10 = vector.broadcast %cst_4 : f32 to vector<8x128xf32>
      %c0_5 = arith.constant 0 : index
      %c0_6 = arith.constant 0 : index
      %11 = vector.load %arg5[%c0_5, %c0_6] : memref<8x128xf32, #tpu.memory_space<vmem>>, vector<8x128xf32>
      tpu.vector_store %arg5[%c0_5, %c0_6], %10 {strides = array<i32>} : memref<8x128xf32, #tpu.memory_space<vmem>>, vector<8x128xf32>,
    } else {
    }
    %c1_i32 = arith.constant 1 : i32
    %3 = arith.muli %arg0, %c1_i32 : i32
    %4 = arith.addi %3, %arg1 : i32
    %c1_i32_1 = arith.constant 1 : i32
    %5 = arith.cmpi slt, %4, %c1_i32_1 : i32
    %6 = arith.extui %5 : i1 to i32
    %c0_i32_2 = arith.constant 0 : i32
    %7 = arith.cmpi ne, %6, %c0_i32_2 : i32
    scf.if %7 {
      %c0 = arith.constant 0 : index
      %c0_3 = arith.constant 0 : index
      %8 = vector.load %arg2[%c0, %c0_3] : memref<16x128xf32, #tpu.memory_space<vmem>>, vector<16x128xf32>
      %9 = arith.negf %8 : vector<16x128xf32>
      %10 = math.exp %9 : vector<16x128xf32>
      %cst = arith.constant 1.000000e+00 : f32
      %11 = vector.broadcast %cst : f32 to vector<16x128xf32>
      %12 = arith.addf %11, %10 : vector<16x128xf32>
      %13 = arith.divf %11, %12 : vector<16x128xf32>
      %c0_4 = arith.constant 0 : index
      %c0_5 = arith.constant 0 : index
      %14 = vector.load %arg3[%c0_4, %c0_5] : memref<16x128xf32, #tpu.memory_space<vmem>>, vector<16x128xf32>
      %c0_6 = arith.constant 0 : index
      %c0_7 = arith.constant 0 : index
      %15 = vector.load %arg4[%c0_6, %c0_7] : memref<8x128xf32, #tpu.memory_space<vmem>>, vector<8x128xf32>
      %16 = arith.mulf %13, %14 : vector<16x128xf32>
      %17 = vector.shape_cast %16 : vector<16x128xf32> to vector<2x8x128xf32>
      %cst_8 = arith.constant dense<0.000000e+00> : vector<8x128xf32>
      %18 = vector.multi_reduction <add>, %17, %cst_8 [0] : vector<2x8x128xf32> to vector<8x128xf32>
      %19 = arith.addf %15, %18 : vector<8x128xf32>
      %c0_9 = arith.constant 0 : index
      %c0_10 = arith.constant 0 : index
      %20 = vector.load %arg4[%c0_9, %c0_10] : memref<8x128xf32, #tpu.memory_space<vmem>>, vector<8x128xf32>
      tpu.vector_store %arg4[%c0_9, %c0_10], %19 {strides = array<i32>} : memref<8x128xf32, #tpu.memory_space<vmem>>, vector<8x128xf32>,
      %c0_11 = arith.constant 0 : index
      %c0_12 = arith.constant 0 : index
      %21 = vector.load %arg5[%c0_11, %c0_12] : memref<8x128xf32, #tpu.memory_space<vmem>>, vector<8x128xf32>
      %22 = arith.addf %13, %14 : vector<16x128xf32>
      %23 = vector.shape_cast %22 : vector<16x128xf32> to vector<2x8x128xf32>
      %cst_13 = arith.constant dense<0.000000e+00> : vector<8x128xf32>
      %24 = vector.multi_reduction <add>, %23, %cst_13 [0] : vector<2x8x128xf32> to vector<8x128xf32>
      %25 = arith.addf %21, %24 : vector<8x128xf32>
      %c0_14 = arith.constant 0 : index
      %c0_15 = arith.constant 0 : index
      %26 = vector.load %arg5[%c0_14, %c0_15] : memref<8x128xf32, #tpu.memory_space<vmem>>, vector<8x128xf32>
      tpu.vector_store %arg5[%c0_14, %c0_15], %25 {strides = array<i32>} : memref<8x128xf32, #tpu.memory_space<vmem>>, vector<8x128xf32>,
    } else {
    }
    return
  }
  func.func @transform_0(%arg0: i32, %arg1: i32) -> (i32, i32) {
    %c1_i32 = arith.constant 1 : i32
    %0 = arith.muli %arg0, %c1_i32 : i32
    %1 = arith.addi %0, %arg1 : i32
    %c0_i32 = arith.constant 0 : i32
    %2 = arith.minsi %1, %c0_i32 : i32
    %c0_i32_0 = arith.constant 0 : i32
    %c0_i32_1 = arith.constant 0 : i32
    return %2, %c0_i32_0 : i32, i32
  }
  func.func @transform_1(%arg0: i32, %arg1: i32) -> (i32, i32) {
    %c1_i32 = arith.constant 1 : i32
    %0 = arith.muli %arg0, %c1_i32 : i32
    %1 = arith.addi %0, %arg1 : i32
    %c0_i32 = arith.constant 0 : i32
    %2 = arith.minsi %1, %c0_i32 : i32
    %c0_i32_0 = arith.constant 0 : i32
    %c0_i32_1 = arith.constant 0 : i32
    return %2, %c0_i32_0 : i32, i32
  }
  func.func @transform_2(%arg0: i32, %arg1: i32) -> (i32, i32) {
    %c0_i32 = arith.constant 0 : i32
    %c0_i32_0 = arith.constant 0 : i32
    return %arg0, %c0_i32 : i32, i32
  }
  func.func @transform_3(%arg0: i32, %arg1: i32) -> (i32, i32) {
    %c0_i32 = arith.constant 0 : i32
    %c0_i32_0 = arith.constant 0 : i32
    return %arg0, %c0_i32 : i32, i32
  }
}

</mosaic_0001>

<llo_original>
// kernel: tpu_custom_call.1
$region0: #{tpu_custom_call.1}
  #allocation0 [shape = 'u32[]', space=smem, size = 0x4, offset = 0x4, fixed_abs, tag = 'smem constant byte address 0x4 - core index']
  #allocation1 [shape = 'u32[144,128]{1,0:T(1,128)}', space=vmem, size = 0x12000, scoped, tag = 'internal scratch']
  %s0 = inlined_call_operand.hbm [shape: f32[16,128], index: 0, kind: input, shape index: {}]
  %s1 = inlined_call_operand.hbm [shape: f32[16,128], index: 1, kind: input, shape index: {}]
  %s2 = inlined_call_operand.hbm [shape: f32[8,128], index: 2, kind: output, shape index: {0}]
  %s3 = inlined_call_operand.hbm [shape: f32[8,128], index: 3, kind: output, shape index: {1}]
  %4 = xla_tuple %s2, %s3
  %s5 = sld [smem:[#allocation0]]
  $region42: #{tpu_custom_call.1} parent=0
    _
  %s7 = ssub.s32 1, %s5
  %s8 = scalar_select 0, %s7, %s5
  $region1: #{tpu_custom_call.1} parent=0
    #allocation2 [shape = 'u8[8192]{0}', space=vmem, size = 0x2000, scoped, tag = 'input window, operand 0, single buffered']
    #allocation3 [shape = 's32[1]{0}', space=sflag, size = 0x4, scoped, tag = 'scoped memory for tpu_custom_call.1']
    #allocation4 [shape = 's32[1]{0}', space=sflag, size = 0x4, scoped, tag = 'scoped memory for tpu_custom_call.1']
    #allocation5 [shape = 'u8[8192]{0}', space=vmem, size = 0x2000, scoped, tag = 'input window, operand 1, single buffered']
    #allocation6 [shape = 's32[1]{0}', space=sflag, size = 0x4, scoped, tag = 'scoped memory for tpu_custom_call.1']
    #allocation7 [shape = 'u8[4096]{0}', space=vmem, size = 0x1000, scoped, tag = 'output window, operand 0, single buffered']
    #allocation8 [shape = 'u8[4096]{0}', space=vmem, size = 0x1000, scoped, tag = 'output window, operand 1, single buffered']
    #allocation9 [shape = 's32[1]{0}', space=sflag, size = 0x4, scoped, tag = 'scoped memory for tpu_custom_call.1']
    %9 = vsyncpa [#allocation3], 0
    %10 = vsyncpa [#allocation6], 0
    %11 = vsyncpa [#allocation4], 0
    %12 = vsyncpa [#allocation9], 0
    // Predicated region
    $region2: #{tpu_custom_call.1} parent=1 // pred_check
      _
    $region3: #{tpu_custom_call.1} parent=1 // pred_check_branch
      %14 = sbr.rel (0) target = $region5
    $region4: #{tpu_custom_call.1} parent=1 // pred_region
      %s15 = sadd.s32 0, 0
      %p16 = scmp.lt.s32.totalorder %s15, 0
      %s17 = scalar_select %p16, %s15, 0
      %s18 = smul.u32 2, %s17
      %s20 = ssub.s32 256, 256
      %21 = vsyncadd [#allocation3], %s20
      %s22 = smul.addr %s18, 128
      %s23 = scalar_lea.hbm %s0, %s22
      %s24 = sshll.u32 [#allocation2], 4
      %s25 = int_to_ptr.vmem [resolvable:$true] %s24
      %30 = dma.hbm_to_vmem [thread:$0]  %s23, 256, %s25, [#allocation3], 128, 128, 8
    $region5: #{tpu_custom_call.1} parent=1 // pred_fallthru
      _
    // Predicated region
    $region6: #{tpu_custom_call.1} parent=1 // pred_check
      _
    $region7: #{tpu_custom_call.1} parent=1 // pred_check_branch
      %32 = sbr.rel (0) target = $region9
    $region8: #{tpu_custom_call.1} parent=1 // pred_region
      %s33 = sadd.s32 0, 0
      %p34 = scmp.lt.s32.totalorder %s33, 0
      %s35 = scalar_select %p34, %s33, 0
      %s36 = smul.u32 2, %s35
      %s38 = ssub.s32 256, 256
      %39 = vsyncadd [#allocation6], %s38
      %s40 = smul.addr %s36, 128
      %s41 = scalar_lea.hbm %s1, %s40
      %s42 = sshll.u32 [#allocation5], 4
      %s43 = int_to_ptr.vmem [resolvable:$true] %s42
      %48 = dma.hbm_to_vmem [thread:$0]  %s41, 256, %s43, [#allocation6], 128, 128, 8
    $region9: #{tpu_custom_call.1} parent=1 // pred_fallthru
      _
    // Predicated region
    $region10: #{tpu_custom_call.1} parent=1 // pred_check
      _
    $region11: #{tpu_custom_call.1} parent=1 // pred_check_branch
      %50 = sbr.rel (0) target = $region13
    $region12: #{tpu_custom_call.1} parent=1 // pred_region
      %51 = dma.done [#allocation3], 256
    $region13: #{tpu_custom_call.1} parent=1 // pred_fallthru
      _
    // Predicated region
    $region14: #{tpu_custom_call.1} parent=1 // pred_check
      _
    $region15: #{tpu_custom_call.1} parent=1 // pred_check_branch
      %53 = sbr.rel (0) target = $region17
    $region16: #{tpu_custom_call.1} parent=1 // pred_region
      %54 = dma.done [#allocation6], 256
    $region17: #{tpu_custom_call.1} parent=1 // pred_fallthru
      _
    %s55 = sadd.s32 0, 0
    %p56 = scmp.lt.s32.totalorder %s55, 0
    %s57 = scalar_select %p56, %s55, 0
    %s58 = smul.u32 2, %s57
    %s59 = sadd.s32 0, 0
    %p60 = scmp.lt.s32.totalorder %s59, 0
    %s61 = scalar_select %p60, %s59, 0
    %s62 = smul.u32 2, %s61
    %p63 = scmp.eq.s32.totalorder 0, 0
    // Predicated region
    $region18: #{tpu_custom_call.1} parent=1 // pred_check
      %p64 = pneg %p63
    $region19: #{tpu_custom_call.1} parent=1 // pred_check_branch
      %66 = sbr.rel (%p64) target = $region21
    $region20: #{tpu_custom_call.1} parent=1 // pred_region
      %67 = vst [vmem:[#allocation7] sm:$0xff] 0.0
      %68 = vst [vmem:[#allocation8] sm:$0xff] 0.0
    $region21: #{tpu_custom_call.1} parent=1 // pred_fallthru
      _
    %s69 = sadd.s32 0, 0
    %p70 = scmp.lt.s32.totalorder %s69, 1
    // Predicated region
    $region22: #{tpu_custom_call.1} parent=1 // pred_check
      %p71 = pneg %p70
    $region23: #{tpu_custom_call.1} parent=1 // pred_check_branch
      %73 = sbr.rel (%p71) target = $region25
    $region24: #{tpu_custom_call.1} parent=1 // pred_region
      %v74 = vld [vmem:[#allocation2] sm:$0xff]
      %v75 = vld [vmem:[#allocation2 + $0x8] sm:$0xff]
      %v76 = vxor.u32 %v74, 2147483648
      %v77 = vxor.u32 %v75, 2147483648
      %v78 = vmul.f32 %v76, 1.442695
      %v79 = vpow.pop %v78
      %v80 = vmul.f32 %v77, 1.442695
      %v81 = vpow.pop %v80
      %v82 = vadd.f32 %v79, 1.0
      %v83 = vadd.f32 %v81, 1.0
      %v84 = vrcp.pop %v82
      %v85 = vmul.f32 1.0, %v84
      %v86 = vrcp.pop %v83
      %v87 = vmul.f32 1.0, %v86
      %v88 = vld [vmem:[#allocation5] sm:$0xff]
      %v89 = vld [vmem:[#allocation5 + $0x8] sm:$0xff]
      %v90 = vld [vmem:[#allocation7] sm:$0xff]
      %v91 = vmul.f32 %v85, %v88
      %v92 = vmul.f32 %v87, %v89
      %v93 = vadd.f32 %v91, %v92
      %v94 = vadd.f32 %v90, %v93
      %95 = vst [vmem:[#allocation7] sm:$0xff] %v94
      %v96 = vld [vmem:[#allocation8] sm:$0xff]
      %v97 = vadd.f32 %v85, %v88
      %v98 = vadd.f32 %v87, %v89
      %v99 = vadd.f32 %v97, %v98
      %v100 = vadd.f32 %v96, %v99
      %101 = vst [vmem:[#allocation8] sm:$0xff] %v100
    $region25: #{tpu_custom_call.1} parent=1 // pred_fallthru
      _
    // Predicated region
    $region26: #{tpu_custom_call.1} parent=1 // pred_check
      _
    $region27: #{tpu_custom_call.1} parent=1 // pred_check_branch
      %103 = sbr.rel (0) target = $region29
    $region28: #{tpu_custom_call.1} parent=1 // pred_region
      %s105 = ssub.s32 128, 128
      %106 = vsyncadd [#allocation4], %s105
      %s108 = sshll.u32 [#allocation7], 4
      %s109 = int_to_ptr.vmem [resolvable:$true] %s108
      %111 = dma.vmem_to_hbm [thread:$0]  %s109, 128, %s2, [#allocation4]
    $region29: #{tpu_custom_call.1} parent=1 // pred_fallthru
      _
    // Predicated region
    $region30: #{tpu_custom_call.1} parent=1 // pred_check
      _
    $region31: #{tpu_custom_call.1} parent=1 // pred_check_branch
      %113 = sbr.rel (0) target = $region33
    $region32: #{tpu_custom_call.1} parent=1 // pred_region
      %s115 = ssub.s32 128, 128
      %116 = vsyncadd [#allocation9], %s115
      %s118 = sshll.u32 [#allocation8], 4
      %s119 = int_to_ptr.vmem [resolvable:$true] %s118
      %121 = dma.vmem_to_hbm [thread:$0]  %s119, 128, %s3, [#allocation9]
    $region33: #{tpu_custom_call.1} parent=1 // pred_fallthru
      _
    // Predicated region
    $region34: #{tpu_custom_call.1} parent=1 // pred_check
      _
    $region35: #{tpu_custom_call.1} parent=1 // pred_check_branch
      %123 = sbr.rel (0) target = $region37
    $region36: #{tpu_custom_call.1} parent=1 // pred_region
      %124 = dma.done [#allocation4], 128
    $region37: #{tpu_custom_call.1} parent=1 // pred_fallthru
      _
    // Predicated region
    $region38: #{tpu_custom_call.1} parent=1 // pred_check
      _
    $region39: #{tpu_custom_call.1} parent=1 // pred_check_branch
      %126 = sbr.rel (0) target = $region41
    $region40: #{tpu_custom_call.1} parent=1 // pred_region
      %127 = dma.done [#allocation9], 128
    $region41: #{tpu_custom_call.1} parent=1 // pred_fallthru
      _
    %128 = vsyncpa [#allocation3], 1
    %129 = vsyncpa [#allocation6], 1
    %130 = vsyncpa [#allocation4], 1
    %131 = vsyncpa [#allocation9], 1

</llo_original>
